<compile_context>
chip_gen: v7x
topology: tpu7x:2x2x1
jax: 0.10.0
libtpu: 0.0.40
codegen_flags: <defaults>
</compile_context>

<pallas_src>
import jax
import jax.numpy as jnp
from jax.experimental import pallas as pl
from jax.experimental.pallas import tpu as pltpu


HALO = 2  # two chained k=3 convs -> 2 columns of left context per window


# ----------------------------- Pallas kernel --------------------------------
def _make_kernel(L, TL, TWP, has_projection):
    """L: real sequence length, TL: output tile width (mult of 128),
    TWP: in-kernel window width = TL + 128 (mult of 128)."""

    def kernel(x_ref, w1_ref, t1_ref, w2_ref, t2_ref, *rest):
        if has_projection:
            wsc_ref, tsc_ref, out_ref = rest
        else:
            (out_ref,) = rest

        lt = pl.program_id(1)
        start = pl.multiple_of(lt * TL, 128)       # lane-aligned window start

        # Haloed window sliced from the VMEM-resident padded row (no re-DMA
        # along lt; no wrapper-side halo duplication).
        xw = x_ref[:, pl.ds(start, TWP)]           # (C_in, TWP) f32
        xb = xw.astype(jnp.bfloat16)               # bf16 only for MXU operands

        def conv3(op_b, w_ref, t_ref):
            # y[:, j] = W[0] @ op[:, j-1] + W[1] @ op[:, j] + W[2] @ op[:, j+1]
            # Three dots share one operand; the tap shifts are applied to the
            # dot RESULTS via XLU rolls (dot commutes with a column roll of
            # its RHS) -> no unaligned-slice operand copies, no 3*C stack.
            d0 = jnp.dot(w_ref[0], op_b, preferred_element_type=jnp.float32)
            d1 = jnp.dot(w_ref[1], op_b, preferred_element_type=jnp.float32)
            d2 = jnp.dot(w_ref[2], op_b, preferred_element_type=jnp.float32)
            return (pltpu.roll(d0, shift=1, axis=1)        # d0[:, j-1]
                    + d1
                    + pltpu.roll(d2, shift=TWP - 1, axis=1)  # d2[:, j+1]
                    + t_ref[...])

        # conv1 (BN1 scale folded into w1) -> shift -> ReLU, full window width.
        h = jnp.maximum(conv3(xb, w1_ref, t1_ref), 0.0)

        # conv2's zero padding must see ZERO h outside the real sequence, not
        # conv1 extended past it.  Single (1, TWP) iota row vs two scalar
        # thresholds; only edge tiles have any column where this bites.
        col = jax.lax.broadcasted_iota(jnp.int32, (1, TWP), 1)
        pos = start + col - HALO                   # absolute sequence position
        h = jnp.where((pos >= 0) & (pos < L), h, 0.0)

        # conv2 (BN2 scale folded into w2) -> shift, full window width.
        y = conv3(h.astype(jnp.bfloat16), w2_ref, t2_ref)

        # Shortcut, still at window coordinates.
        if has_projection:
            res = jnp.dot(wsc_ref[...], xb,
                          preferred_element_type=jnp.float32) + tsc_ref[...]
        else:
            res = xw                               # exact f32 passthrough

        o = jnp.maximum(y + res, 0.0)
        # Valid outputs sit at window cols [HALO, HALO+TL): one XLU roll plus
        # an aligned static slice instead of a lane-offset-2 slice copy.
        out_ref[...] = pltpu.roll(o, shift=TWP - HALO, axis=1)[:, :TL].astype(
            out_ref.dtype)

    return kernel


# ------------------------------- wrapper -------------------------------------
def _round_up(v, m):
    return -(-v // m) * m


def _vmem_estimate(C_in, C_out, tl, lp):
    twp = tl + 128
    return 4 * (2 * C_in * (lp + 128)      # resident padded x row (dbl-buffered)
                + 2 * C_out * tl           # output tile (dbl-buffered)
                + 2 * C_in * twp           # xw / xb working copies
                + 8 * C_out * twp)         # h / dot results / rolls (f32)


def _choose_tiles(B, C_in, C_out, L, max_l_tile, vmem_budget_bytes=40 * 2**20):
    """Pick (TL, Lp): TL multiple of 128 (lane-dense stores), Lp = padded L.

    Preference: fit a conservative VMEM budget (sized for v7x's 64 MiB
    physical VMEM), minimal padding waste, >= 2 grid steps so both v7x
    TensorCores get work, then the largest tile (amortize per-step overhead).
    """
    lp0 = _round_up(L, 128)
    max_tl = max(128, min((max_l_tile // 128) * 128, lp0))
    best_key, best = None, None
    for tl in range(128, max_tl + 1, 128):
        lp = _round_up(L, tl)
        nt = lp // tl
        est = _vmem_estimate(C_in, C_out, tl, lp)
        key = (0 if est <= vmem_budget_bytes else 1,   # fits v7x VMEM budget
               lp - L,                                 # padding waste
               0 if B * nt >= 2 else 1,                # keep both v7x TCs busy
               -tl)                                    # biggest tile
        if best_key is None or key < best_key:
            best_key, best = key, (tl, lp)
    return best


def residual_block_forward(x_ncl, params, max_l_tile=2048,
                           out_dtype=jnp.float32):
    """x_ncl: (B, C_in, L) float32 (PyTorch NCL). Returns (B, C_out, L)."""
    B, C_in, L = x_ncl.shape
    C_out = params["w1"].shape[0]
    has_projection = C_in != C_out
    eps = 1e-5

    TL, Lp = _choose_tiles(B, C_in, C_out, L, max_l_tile)
    nt = Lp // TL
    TWP = TL + 128                 # in-kernel window width (multiple of 128)
    Wpad = Lp + 128                # padded row width = HALO + L + right zeros

    # ONE zero-pad of the input (left halo + lane alignment).  No per-tile
    # halo duplication / stack -> no extra HBM round trip of the activations.
    xp = jnp.pad(x_ncl, ((0, 0), (0, 0), (HALO, Wpad - HALO - L)))

    def fold(gamma, beta, mean, var, bias):
        # BN(conv + bias) = conv*s + t,  s = g/sqrt(v+eps),  t = (bias-m)*s + b
        s = gamma / jnp.sqrt(var + eps)
        t = (bias - mean) * s + beta
        return s, t.reshape(C_out, 1).astype(jnp.float32)

    s1, t1 = fold(params["bn1_g"], params["bn1_b"], params["bn1_m"],
                  params["bn1_v"], params["b1"])
    s2, t2 = fold(params["bn2_g"], params["bn2_b"], params["bn2_m"],
                  params["bn2_v"], params["b2"])
    # torch (C_out, C_i, 3) -> per-tap (3, C_out, C_i), BN scale folded, bf16.
    w1f = jnp.transpose(params["w1"] * s1[:, None, None],
                        (2, 0, 1)).astype(jnp.bfloat16)
    w2f = jnp.transpose(params["w2"] * s2[:, None, None],
                        (2, 0, 1)).astype(jnp.bfloat16)

    inputs = [xp, w1f, t1, w2f, t2]
    in_specs = [
        # padded x row: block index constant along lt -> VMEM-resident per b
        pl.BlockSpec((None, C_in, Wpad), lambda b, lt: (b, 0, 0)),
        pl.BlockSpec((3, C_out, C_in), lambda b, lt: (0, 0, 0)),
        pl.BlockSpec((C_out, 1), lambda b, lt: (0, 0)),
        pl.BlockSpec((3, C_out, C_out), lambda b, lt: (0, 0, 0)),
        pl.BlockSpec((C_out, 1), lambda b, lt: (0, 0)),
    ]
    if has_projection:
        ssc, tsc = fold(params["bnsc_g"], params["bnsc_b"], params["bnsc_m"],
                        params["bnsc_v"], params["bsc"])
        wscf = (params["wsc"][:, :, 0] * ssc[:, None]).astype(jnp.bfloat16)
        inputs += [wscf, tsc]
        in_specs += [pl.BlockSpec((C_out, C_in), lambda b, lt: (0, 0)),
                     pl.BlockSpec((C_out, 1), lambda b, lt: (0, 0))]

    est = _vmem_estimate(C_in, C_out, TL, Lp)
    out = pl.pallas_call(
        _make_kernel(L, TL, TWP, has_projection),
        out_shape=jax.ShapeDtypeStruct((B, C_out, Lp), out_dtype),
        grid_spec=pltpu.PrefetchScalarGridSpec(
            num_scalar_prefetch=0,
            grid=(B, nt),
            in_specs=in_specs,
            out_specs=pl.BlockSpec((None, C_out, TL), lambda b, lt: (b, 0, lt)),
        ),
        compiler_params=pltpu.CompilerParams(
            dimension_semantics=("parallel", "parallel"),
            # capped at 48 MiB so it is legal on v7x (64 MiB physical) too
            vmem_limit_bytes=int(min(48 * 2**20, max(32 * 2**20, 2 * est)))),
    )(*inputs)
    return out if Lp == L else out[:, :, :L]


# --------------------------- reference (pure JAX) -----------------------------
def residual_block_ref(x, p, c_in, c_out):
    eps = 1e-5

    def conv1d(x, w, b, pad):
        y = jax.lax.conv_general_dilated(
            x, w, window_strides=(1,), padding=((pad, pad),),
            dimension_numbers=("NCH", "OIH", "NCH"))
        return y + b[None, :, None]

    def bn(x, g, beta, m, v):
        return ((x - m[None, :, None]) / jnp.sqrt(v[None, :, None] + eps)
                * g[None, :, None] + beta[None, :, None])

    if c_in != c_out:
        res = bn(conv1d(x, p["wsc"], p["bsc"], 0),
                 p["bnsc_g"], p["bnsc_b"], p["bnsc_m"], p["bnsc_v"])
    else:
        res = x
    h = jnp.maximum(bn(conv1d(x, p["w1"], p["b1"], 1),
                       p["bn1_g"], p["bn1_b"], p["bn1_m"], p["bn1_v"]), 0.0)
    h = bn(conv1d(h, p["w2"], p["b2"], 1),
           p["bn2_g"], p["bn2_b"], p["bn2_m"], p["bn2_v"])
    return jnp.maximum(h + res, 0.0)


# ------------------------------ param init -----------------------------------
def init_params(key, c_in, c_out):
    ks = jax.random.split(key, 20)
    n = lambda k, s: 0.1 * jax.random.normal(k, s, jnp.float32)
    p = {
        "w1": n(ks[0], (c_out, c_in, 3)), "b1": n(ks[1], (c_out,)),
        "w2": n(ks[2], (c_out, c_out, 3)), "b2": n(ks[3], (c_out,)),
        "bn1_g": 1.0 + n(ks[4], (c_out,)), "bn1_b": n(ks[5], (c_out,)),
        "bn1_m": n(ks[6], (c_out,)),
        "bn1_v": 1.0 + 0.2 * jax.random.uniform(ks[7], (c_out,), jnp.float32),
        "bn2_g": 1.0 + n(ks[8], (c_out,)), "bn2_b": n(ks[9], (c_out,)),
        "bn2_m": n(ks[10], (c_out,)),
        "bn2_v": 1.0 + 0.2 * jax.random.uniform(ks[11], (c_out,), jnp.float32),
    }
    if c_in != c_out:
        p.update({
            "wsc": n(ks[12], (c_out, c_in, 1)), "bsc": n(ks[13], (c_out,)),
            "bnsc_g": 1.0 + n(ks[14], (c_out,)), "bnsc_b": n(ks[15], (c_out,)),
            "bnsc_m": n(ks[16], (c_out,)),
            "bnsc_v": 1.0 + 0.2 * jax.random.uniform(ks[17], (c_out,),
                                                     jnp.float32),
        })
    return p


if __name__ == "__main__":
    key = jax.random.PRNGKey(0)

    configs = [
        # (B, C_in, C_out, L, max_l_tile, out_dtype, tol)
        (2, 4, 8, 16, 2048, jnp.float32, 3e-2),    # projection shortcut
        (2, 8, 8, 16, 2048, jnp.float32, 3e-2),    # identity shortcut
        (1, 8, 16, 256, 2048, jnp.float32, 3e-2),  # B=1 -> 2 L-tiles (2 TCs)
        (1, 4, 8, 300, 512, jnp.bfloat16, 6e-2),   # L%128!=0, 3 tiles, bf16 out
    ]
    for i, (B, C_IN, C_OUT, L, MTL, ODT, TOL) in enumerate(configs):
        kx, kp, key = jax.random.split(key, 3)
        x = jax.random.normal(kx, (B, C_IN, L), jnp.float32)  # PyTorch (N,C,L)
        params = init_params(kp, C_IN, C_OUT)

        out = jax.block_until_ready(
            residual_block_forward(x, params, max_l_tile=MTL, out_dtype=ODT))
        ref = jax.block_until_ready(residual_block_ref(x, params, C_IN, C_OUT))

        assert out.shape == (B, C_OUT, L), out.shape
        out32 = out.astype(jnp.float32)
        # bf16 MXU operands (f32 accumulate) -> looser tolerance than pure f32
        err = float(jnp.max(jnp.abs(out32 - ref)))
        assert jnp.allclose(out32, ref, atol=TOL, rtol=TOL), \
            f"config {i}: max abs err {err}"

    print("KERNEL_OK")
</pallas_src>

<mosaic_0001>
module attributes {stable_mosaic.version = 11 : i64} {
  func.func @kernel(%arg0: i32, %arg1: i32, %arg2: memref<1x4x256xf32, #tpu.memory_space<vmem>>, %arg3: memref<3x8x4xbf16, #tpu.memory_space<vmem>>, %arg4: memref<8x1xf32, #tpu.memory_space<vmem>>, %arg5: memref<3x8x8xbf16, #tpu.memory_space<vmem>>, %arg6: memref<8x1xf32, #tpu.memory_space<vmem>>, %arg7: memref<8x4xbf16, #tpu.memory_space<vmem>>, %arg8: memref<8x1xf32, #tpu.memory_space<vmem>>, %arg9: memref<1x8x128xf32, #tpu.memory_space<vmem>>) attributes {dimension_semantics = [#tpu.dimension_semantics<parallel>, #tpu.dimension_semantics<parallel>], iteration_bounds = array<i64: 2, 1>, scalar_prefetch = 0 : i64, scratch_operands = 0 : i64, tpu.core_type = #tpu.core_type<tc>, window_params = [{transform_indices = @transform_0, window_bounds = array<i64: 1, 4, 256>}, {pipeline_mode = #tpu.pipeline_mode<synchronous>, transform_indices = @transform_1, window_bounds = array<i64: 3, 8, 4>}, {pipeline_mode = #tpu.pipeline_mode<synchronous>, transform_indices = @transform_2, window_bounds = array<i64: 8, 1>}, {pipeline_mode = #tpu.pipeline_mode<synchronous>, transform_indices = @transform_3, window_bounds = array<i64: 3, 8, 8>}, {pipeline_mode = #tpu.pipeline_mode<synchronous>, transform_indices = @transform_4, window_bounds = array<i64: 8, 1>}, {pipeline_mode = #tpu.pipeline_mode<synchronous>, transform_indices = @transform_5, window_bounds = array<i64: 8, 4>}, {pipeline_mode = #tpu.pipeline_mode<synchronous>, transform_indices = @transform_6, window_bounds = array<i64: 8, 1>}, {transform_indices = @transform_7, window_bounds = array<i64: 1, 8, 128>}]} {
    %c128_i32 = arith.constant 128 : i32
    %0 = arith.muli %arg1, %c128_i32 : i32
    %1 = tpu.assume_multiple %0, 128 : i32
    %c0 = arith.constant 0 : index
    %c0_0 = arith.constant 0 : index
    %2 = arith.index_cast %1 : i32 to index
    %3 = vector.load %arg2[%c0, %c0_0, %2] : memref<1x4x256xf32, #tpu.memory_space<vmem>>, vector<1x4x256xf32>
    %4 = vector.shape_cast %3 : vector<1x4x256xf32> to vector<4x256xf32>
    %5 = arith.truncf %4 : vector<4x256xf32> to vector<4x256xbf16>
    %c0_1 = arith.constant 0 : index
    %c0_2 = arith.constant 0 : index
    %c0_3 = arith.constant 0 : index
    %6 = vector.load %arg3[%c0_1, %c0_2, %c0_3] : memref<3x8x4xbf16, #tpu.memory_space<vmem>>, vector<1x8x4xbf16>
    %7 = vector.shape_cast %6 : vector<1x8x4xbf16> to vector<8x4xbf16>
    %cst = arith.constant dense<0.000000e+00> : vector<8x256xf32>
    %8 = tpu.matmul %7, %5, %cst {dimension_numbers = #tpu.dot_dimension_numbers<[1], [0], [0], [1], [0, 0, 1, 1], [], []>} : vector<8x4xbf16>, vector<4x256xbf16>, vector<8x256xf32> -> vector<8x256xf32>
    %c1 = arith.constant 1 : index
    %c0_4 = arith.constant 0 : index
    %c0_5 = arith.constant 0 : index
    %9 = vector.load %arg3[%c1, %c0_4, %c0_5] : memref<3x8x4xbf16, #tpu.memory_space<vmem>>, vector<1x8x4xbf16>
    %10 = vector.shape_cast %9 : vector<1x8x4xbf16> to vector<8x4xbf16>
    %cst_6 = arith.constant dense<0.000000e+00> : vector<8x256xf32>
    %11 = tpu.matmul %10, %5, %cst_6 {dimension_numbers = #tpu.dot_dimension_numbers<[1], [0], [0], [1], [0, 0, 1, 1], [], []>} : vector<8x4xbf16>, vector<4x256xbf16>, vector<8x256xf32> -> vector<8x256xf32>
    %c2 = arith.constant 2 : index
    %c0_7 = arith.constant 0 : index
    %c0_8 = arith.constant 0 : index
    %12 = vector.load %arg3[%c2, %c0_7, %c0_8] : memref<3x8x4xbf16, #tpu.memory_space<vmem>>, vector<1x8x4xbf16>
    %13 = vector.shape_cast %12 : vector<1x8x4xbf16> to vector<8x4xbf16>
    %cst_9 = arith.constant dense<0.000000e+00> : vector<8x256xf32>
    %14 = tpu.matmul %13, %5, %cst_9 {dimension_numbers = #tpu.dot_dimension_numbers<[1], [0], [0], [1], [0, 0, 1, 1], [], []>} : vector<8x4xbf16>, vector<4x256xbf16>, vector<8x256xf32> -> vector<8x256xf32>
    %c1_i32 = arith.constant 1 : i32
    %15 = tpu.dynamic_rotate %8 by %c1_i32 dim 1 : vector<8x256xf32>, i32 -> vector<8x256xf32>
    %16 = arith.addf %15, %11 : vector<8x256xf32>
    %c255_i32 = arith.constant 255 : i32
    %17 = tpu.dynamic_rotate %14 by %c255_i32 dim 1 : vector<8x256xf32>, i32 -> vector<8x256xf32>
    %18 = arith.addf %16, %17 : vector<8x256xf32>
    %c0_10 = arith.constant 0 : index
    %c0_11 = arith.constant 0 : index
    %19 = vector.load %arg4[%c0_10, %c0_11] : memref<8x1xf32, #tpu.memory_space<vmem>>, vector<8x1xf32>
    %20 = vector.broadcast %19 : vector<8x1xf32> to vector<8x256xf32>
    %21 = arith.addf %18, %20 : vector<8x256xf32>
    %cst_12 = arith.constant 0.000000e+00 : f32
    %22 = vector.broadcast %cst_12 : f32 to vector<8x256xf32>
    %23 = arith.maximumf %21, %22 : vector<8x256xf32>
    %24 = tpu.iota {dimensions = array<i32: 1>} : vector<1x256xi32>
    %25 = vector.broadcast %1 : i32 to vector<1x256xi32>
    %26 = arith.addi %25, %24 : vector<1x256xi32>
    %c2_i32 = arith.constant 2 : i32
    %27 = vector.broadcast %c2_i32 : i32 to vector<1x256xi32>
    %28 = arith.subi %26, %27 : vector<1x256xi32>
    %c0_i32 = arith.constant 0 : i32
    %29 = vector.broadcast %c0_i32 : i32 to vector<1x256xi32>
    %30 = arith.cmpi sge, %28, %29 : vector<1x256xi32>
    %c16_i32 = arith.constant 16 : i32
    %31 = vector.broadcast %c16_i32 : i32 to vector<1x256xi32>
    %32 = arith.cmpi slt, %28, %31 : vector<1x256xi32>
    %33 = arith.andi %30, %32 : vector<1x256xi1>
    %cst_13 = arith.constant 0.000000e+00 : f32
    %34 = vector.shape_cast %33 : vector<1x256xi1> to vector<1x256xi1>
    %35 = vector.broadcast %34 : vector<1x256xi1> to vector<8x256xi1>
    %36 = vector.broadcast %cst_13 : f32 to vector<8x256xf32>
    %37 = arith.select %35, %23, %36 : vector<8x256xi1>, vector<8x256xf32>
    %38 = arith.truncf %37 : vector<8x256xf32> to vector<8x256xbf16>
    %c0_14 = arith.constant 0 : index
    %c0_15 = arith.constant 0 : index
    %c0_16 = arith.constant 0 : index
    %39 = vector.load %arg5[%c0_14, %c0_15, %c0_16] : memref<3x8x8xbf16, #tpu.memory_space<vmem>>, vector<1x8x8xbf16>
    %40 = vector.shape_cast %39 : vector<1x8x8xbf16> to vector<8x8xbf16>
    %cst_17 = arith.constant dense<0.000000e+00> : vector<8x256xf32>
    %41 = tpu.matmul %40, %38, %cst_17 {dimension_numbers = #tpu.dot_dimension_numbers<[1], [0], [0], [1], [0, 0, 1, 1], [], []>} : vector<8x8xbf16>, vector<8x256xbf16>, vector<8x256xf32> -> vector<8x256xf32>
    %c1_18 = arith.constant 1 : index
    %c0_19 = arith.constant 0 : index
    %c0_20 = arith.constant 0 : index
    %42 = vector.load %arg5[%c1_18, %c0_19, %c0_20] : memref<3x8x8xbf16, #tpu.memory_space<vmem>>, vector<1x8x8xbf16>
    %43 = vector.shape_cast %42 : vector<1x8x8xbf16> to vector<8x8xbf16>
    %cst_21 = arith.constant dense<0.000000e+00> : vector<8x256xf32>
    %44 = tpu.matmul %43, %38, %cst_21 {dimension_numbers = #tpu.dot_dimension_numbers<[1], [0], [0], [1], [0, 0, 1, 1], [], []>} : vector<8x8xbf16>, vector<8x256xbf16>, vector<8x256xf32> -> vector<8x256xf32>
    %c2_22 = arith.constant 2 : index
    %c0_23 = arith.constant 0 : index
    %c0_24 = arith.constant 0 : index
    %45 = vector.load %arg5[%c2_22, %c0_23, %c0_24] : memref<3x8x8xbf16, #tpu.memory_space<vmem>>, vector<1x8x8xbf16>
    %46 = vector.shape_cast %45 : vector<1x8x8xbf16> to vector<8x8xbf16>
    %cst_25 = arith.constant dense<0.000000e+00> : vector<8x256xf32>
    %47 = tpu.matmul %46, %38, %cst_25 {dimension_numbers = #tpu.dot_dimension_numbers<[1], [0], [0], [1], [0, 0, 1, 1], [], []>} : vector<8x8xbf16>, vector<8x256xbf16>, vector<8x256xf32> -> vector<8x256xf32>
    %c1_i32_26 = arith.constant 1 : i32
    %48 = tpu.dynamic_rotate %41 by %c1_i32_26 dim 1 : vector<8x256xf32>, i32 -> vector<8x256xf32>
    %49 = arith.addf %48, %44 : vector<8x256xf32>
    %c255_i32_27 = arith.constant 255 : i32
    %50 = tpu.dynamic_rotate %47 by %c255_i32_27 dim 1 : vector<8x256xf32>, i32 -> vector<8x256xf32>
    %51 = arith.addf %49, %50 : vector<8x256xf32>
    %c0_28 = arith.constant 0 : index
    %c0_29 = arith.constant 0 : index
    %52 = vector.load %arg6[%c0_28, %c0_29] : memref<8x1xf32, #tpu.memory_space<vmem>>, vector<8x1xf32>
    %53 = vector.broadcast %52 : vector<8x1xf32> to vector<8x256xf32>
    %54 = arith.addf %51, %53 : vector<8x256xf32>
    %c0_30 = arith.constant 0 : index
    %c0_31 = arith.constant 0 : index
    %55 = vector.load %arg7[%c0_30, %c0_31] : memref<8x4xbf16, #tpu.memory_space<vmem>>, vector<8x4xbf16>
    %cst_32 = arith.constant dense<0.000000e+00> : vector<8x256xf32>
    %56 = tpu.matmul %55, %5, %cst_32 {dimension_numbers = #tpu.dot_dimension_numbers<[1], [0], [0], [1], [0, 0, 1, 1], [], []>} : vector<8x4xbf16>, vector<4x256xbf16>, vector<8x256xf32> -> vector<8x256xf32>
    %c0_33 = arith.constant 0 : index
    %c0_34 = arith.constant 0 : index
    %57 = vector.load %arg8[%c0_33, %c0_34] : memref<8x1xf32, #tpu.memory_space<vmem>>, vector<8x1xf32>
    %58 = vector.broadcast %57 : vector<8x1xf32> to vector<8x256xf32>
    %59 = arith.addf %56, %58 : vector<8x256xf32>
    %60 = arith.addf %54, %59 : vector<8x256xf32>
    %cst_35 = arith.constant 0.000000e+00 : f32
    %61 = vector.broadcast %cst_35 : f32 to vector<8x256xf32>
    %62 = arith.maximumf %60, %61 : vector<8x256xf32>
    %c254_i32 = arith.constant 254 : i32
    %63 = tpu.dynamic_rotate %62 by %c254_i32 dim 1 : vector<8x256xf32>, i32 -> vector<8x256xf32>
    %64 = vector.extract_strided_slice %63 {offsets = [0, 0], sizes = [8, 128], strides = [1, 1]} : vector<8x256xf32> to vector<8x128xf32>
    %c0_36 = arith.constant 0 : index
    %c0_37 = arith.constant 0 : index
    %c0_38 = arith.constant 0 : index
    %65 = vector.load %arg9[%c0_36, %c0_37, %c0_38] : memref<1x8x128xf32, #tpu.memory_space<vmem>>, vector<1x8x128xf32>
    %66 = vector.shape_cast %65 : vector<1x8x128xf32> to vector<8x128xf32>
    %67 = vector.shape_cast %64 : vector<8x128xf32> to vector<1x8x128xf32>
    tpu.vector_store %arg9[%c0_36, %c0_37, %c0_38], %67 {strides = array<i32>} : memref<1x8x128xf32, #tpu.memory_space<vmem>>, vector<1x8x128xf32>,
    return
  }
  func.func @transform_0(%arg0: i32, %arg1: i32) -> (i32, i32, i32) {
    %c0_i32 = arith.constant 0 : i32
    %c0_i32_0 = arith.constant 0 : i32
    %c0_i32_1 = arith.constant 0 : i32
    return %arg0, %c0_i32, %c0_i32_0 : i32, i32, i32
  }
  func.func @transform_1(%arg0: i32, %arg1: i32) -> (i32, i32, i32) {
    %c0_i32 = arith.constant 0 : i32
    %c0_i32_0 = arith.constant 0 : i32
    %c0_i32_1 = arith.constant 0 : i32
    %c0_i32_2 = arith.constant 0 : i32
    return %c0_i32, %c0_i32_0, %c0_i32_1 : i32, i32, i32
  }
  func.func @transform_2(%arg0: i32, %arg1: i32) -> (i32, i32) {
    %c0_i32 = arith.constant 0 : i32
    %c0_i32_0 = arith.constant 0 : i32
    %c0_i32_1 = arith.constant 0 : i32
    return %c0_i32, %c0_i32_0 : i32, i32
  }
  func.func @transform_3(%arg0: i32, %arg1: i32) -> (i32, i32, i32) {
    %c0_i32 = arith.constant 0 : i32
    %c0_i32_0 = arith.constant 0 : i32
    %c0_i32_1 = arith.constant 0 : i32
    %c0_i32_2 = arith.constant 0 : i32
    return %c0_i32, %c0_i32_0, %c0_i32_1 : i32, i32, i32
  }
  func.func @transform_4(%arg0: i32, %arg1: i32) -> (i32, i32) {
    %c0_i32 = arith.constant 0 : i32
    %c0_i32_0 = arith.constant 0 : i32
    %c0_i32_1 = arith.constant 0 : i32
    return %c0_i32, %c0_i32_0 : i32, i32
  }
  func.func @transform_5(%arg0: i32, %arg1: i32) -> (i32, i32) {
    %c0_i32 = arith.constant 0 : i32
    %c0_i32_0 = arith.constant 0 : i32
    %c0_i32_1 = arith.constant 0 : i32
    return %c0_i32, %c0_i32_0 : i32, i32
  }
  func.func @transform_6(%arg0: i32, %arg1: i32) -> (i32, i32) {
    %c0_i32 = arith.constant 0 : i32
    %c0_i32_0 = arith.constant 0 : i32
    %c0_i32_1 = arith.constant 0 : i32
    return %c0_i32, %c0_i32_0 : i32, i32
  }
  func.func @transform_7(%arg0: i32, %arg1: i32) -> (i32, i32, i32) {
    %c0_i32 = arith.constant 0 : i32
    %c0_i32_0 = arith.constant 0 : i32
    return %arg0, %c0_i32, %arg1 : i32, i32, i32
  }
}

</mosaic_0001>

<llo_original>
// kernel: tpu_custom_call.1
$region0: #{tpu_custom_call.1}
  #allocation0 [shape = 'u32[]', space=smem, size = 0x4, offset = 0x4, fixed_abs, tag = 'smem constant byte address 0x4 - core index']
  #allocation1 [shape = 'u32[144,128]{1,0:T(1,128)}', space=vmem, size = 0x12000, scoped, tag = 'internal scratch']
  %s0 = inlined_call_operand.vmem [shape: f32[2,4,256], index: 0, kind: input, shape index: {}]
  %s1 = inlined_call_operand.vmem [shape: bf16[3,8,4], index: 1, kind: input, shape index: {}]
  %s2 = inlined_call_operand.vmem [shape: f32[8,1], index: 2, kind: input, shape index: {}]
  %s3 = inlined_call_operand.vmem [shape: bf16[3,8,8], index: 3, kind: input, shape index: {}]
  %s4 = inlined_call_operand.vmem [shape: f32[8,1], index: 4, kind: input, shape index: {}]
  %s5 = inlined_call_operand.vmem [shape: bf16[8,4], index: 5, kind: input, shape index: {}]
  %s6 = inlined_call_operand.vmem [shape: f32[8,1], index: 6, kind: input, shape index: {}]
  %s7 = inlined_call_operand.hbm [shape: f32[2,8,128], index: 7, kind: output, shape index: {}]
  %s8 = sld [smem:[#allocation0]]
  $region61: #{tpu_custom_call.1} parent=0
    _
  %s10 = ssub.s32 1, %s8
  %s11 = scalar_select 0, %s10, %s8
  $region1: #{tpu_custom_call.1} parent=0
    #allocation2 [shape = 'u8[8192]{0}', space=vmem, size = 0x2000, scoped, tag = 'output window, operand 0']
    #allocation3 [shape = 's32[2]{0}', space=sflag, size = 0x8, scoped, tag = 'scoped memory for tpu_custom_call.1']
    %12 = vsyncpa [#allocation3], 0
    %s13 = scalar_lea.sflag [#allocation3], 1
    %14 = vsyncpa %s13, 0
    loop: start=0, step=1, limit=4
    $region2: #{tpu_custom_call.1} parent=1 // loop_pre_header
      _
    $region3: #{tpu_custom_call.1} parent=1 // loop_header
      %s16 = sphi 0, %s20
      %p17 = scmp.ge.s32.totalorder %s16, 4
      %s23 = sphi 0, %s35
      %s24 = sphi 0, %s31
      %s25 = sphi 0, %s23
      %s26 = sphi 0, %s24
      %s27 = sphi 0, %s25
      %s28 = sphi 0, %s26
      %s38 = sphi 0, %s40
      %s41 = sphi 0, %s38
      %s42 = sphi 0, %s41
      %s58 = sphi 0, %s42
      %s62 = sphi 0, %s62
      %s64 = sphi 0, %s62
      %s65 = sphi 0, %s64
      %s79 = sphi 0, %s65
      %s83 = sphi 0, %s83
      %s85 = sphi 0, %s83
      %s86 = sphi 0, %s85
      %s100 = sphi 0, %s86
      %s104 = sphi 0, %s104
      %s106 = sphi 0, %s104
      %s107 = sphi 0, %s106
      %s121 = sphi 0, %s107
      %s125 = sphi 0, %s125
      %s127 = sphi 0, %s125
      %s128 = sphi 0, %s127
      %s142 = sphi 0, %s128
      %s146 = sphi 0, %s146
      %s148 = sphi 0, %s146
      %s149 = sphi 0, %s148
      %s163 = sphi 0, %s149
      %s167 = sphi 0, %s167
      %s169 = sphi 0, %s167
      %s170 = sphi 0, %s169
      %s184 = sphi 0, %s170
      %s192 = sphi 0, %s194
      %s195 = sphi 0, %s192
      %s196 = sphi 0, %s195
      %s212 = sphi 0, %s196
    $region4: #{tpu_custom_call.1} parent=1 // loop_header_branch
      %19 = sbr.rel (%p17) target = $region8
    $region5: #{tpu_custom_call.1} parent=1 // loop_body
      %s21 = ssub.s32 %s16, 1
      %s22 = ssub.s32 %s16, 2
      %s29 = sadd.s32 1, %s24
      %p30 = scmp.ge.s32.totalorder %s29, 1
      %s31 = scalar_select %p30, 0, %s29
      %s32 = sadd.s32 1, %s23
      %s33 = scalar_select %p30, %s32, %s23
      %p34 = scmp.ge.s32.totalorder %s33, 2
      %s35 = scalar_select %p34, 0, %s33
      %s36 = ssub.s32 %s23, %s35
      %p37 = scmp.eq.s32.totalorder %s36, 0
      %s39 = sadd.s32 %s38, 1
      %s40 = scalar_select %p37, %s38, %s39
      %p43 = pneg %p37
      %p44 = scmp.eq.s32.totalorder %s16, 1
      %p45 = por %p43, %p44
      %p46 = scmp.ne.s32.totalorder %s38, %s41
      %p47 = scmp.eq.s32.totalorder %s16, 0
      %p48 = por %p46, %p47
      %p49 = scmp.ne.s32.totalorder %s38, %s41
      %p50 = scmp.eq.s32.totalorder %s21, 1
      %p51 = por %p49, %p50
      %p52 = scmp.ne.s32.totalorder %s41, %s42
      %p53 = scmp.eq.s32.totalorder %s21, 0
      %p54 = por %p52, %p53
      %p55 = scmp.ne.s32.totalorder %s41, %s42
      %p56 = scmp.eq.s32.totalorder %s22, 1
      %p57 = por %p55, %p56
      %p59 = scmp.ne.s32.totalorder %s42, %s58
      %p60 = scmp.eq.s32.totalorder %s22, 0
      %p61 = por %p59, %p60
      %s63 = sadd.s32 %s62, 1
      %p66 = scmp.eq.s32.totalorder %s16, 1
      %p67 = scmp.ne.s32.totalorder %s62, %s64
      %p68 = scmp.eq.s32.totalorder %s16, 0
      %p69 = por %p67, %p68
      %p70 = scmp.ne.s32.totalorder %s62, %s64
      %p71 = scmp.eq.s32.totalorder %s21, 1
      %p72 = por %p70, %p71
      %p73 = scmp.ne.s32.totalorder %s64, %s65
      %p74 = scmp.eq.s32.totalorder %s21, 0
      %p75 = por %p73, %p74
      %p76 = scmp.ne.s32.totalorder %s64, %s65
      %p77 = scmp.eq.s32.totalorder %s22, 1
      %p78 = por %p76, %p77
      %p80 = scmp.ne.s32.totalorder %s65, %s79
      %p81 = scmp.eq.s32.totalorder %s22, 0
      %p82 = por %p80, %p81
      %s84 = sadd.s32 %s83, 1
      %p87 = scmp.eq.s32.totalorder %s16, 1
      %p88 = scmp.ne.s32.totalorder %s83, %s85
      %p89 = scmp.eq.s32.totalorder %s16, 0
      %p90 = por %p88, %p89
      %p91 = scmp.ne.s32.totalorder %s83, %s85
      %p92 = scmp.eq.s32.totalorder %s21, 1
      %p93 = por %p91, %p92
      %p94 = scmp.ne.s32.totalorder %s85, %s86
      %p95 = scmp.eq.s32.totalorder %s21, 0
      %p96 = por %p94, %p95
      %p97 = scmp.ne.s32.totalorder %s85, %s86
      %p98 = scmp.eq.s32.totalorder %s22, 1
      %p99 = por %p97, %p98
      %p101 = scmp.ne.s32.totalorder %s86, %s100
      %p102 = scmp.eq.s32.totalorder %s22, 0
      %p103 = por %p101, %p102
      %s105 = sadd.s32 %s104, 1
      %p108 = scmp.eq.s32.totalorder %s16, 1
      %p109 = scmp.ne.s32.totalorder %s104, %s106
      %p110 = scmp.eq.s32.totalorder %s16, 0
      %p111 = por %p109, %p110
      %p112 = scmp.ne.s32.totalorder %s104, %s106
      %p113 = scmp.eq.s32.totalorder %s21, 1
      %p114 = por %p112, %p113
      %p115 = scmp.ne.s32.totalorder %s106, %s107
      %p116 = scmp.eq.s32.totalorder %s21, 0
      %p117 = por %p115, %p116
      %p118 = scmp.ne.s32.totalorder %s106, %s107
      %p119 = scmp.eq.s32.totalorder %s22, 1
      %p120 = por %p118, %p119
      %p122 = scmp.ne.s32.totalorder %s107, %s121
      %p123 = scmp.eq.s32.totalorder %s22, 0
      %p124 = por %p122, %p123
      %s126 = sadd.s32 %s125, 1
      %p129 = scmp.eq.s32.totalorder %s16, 1
      %p130 = scmp.ne.s32.totalorder %s125, %s127
      %p131 = scmp.eq.s32.totalorder %s16, 0
      %p132 = por %p130, %p131
      %p133 = scmp.ne.s32.totalorder %s125, %s127
      %p134 = scmp.eq.s32.totalorder %s21, 1
      %p135 = por %p133, %p134
      %p136 = scmp.ne.s32.totalorder %s127, %s128
      %p137 = scmp.eq.s32.totalorder %s21, 0
      %p138 = por %p136, %p137
      %p139 = scmp.ne.s32.totalorder %s127, %s128
      %p140 = scmp.eq.s32.totalorder %s22, 1
      %p141 = por %p139, %p140
      %p143 = scmp.ne.s32.totalorder %s128, %s142
      %p144 = scmp.eq.s32.totalorder %s22, 0
      %p145 = por %p143, %p144
      %s147 = sadd.s32 %s146, 1
      %p150 = scmp.eq.s32.totalorder %s16, 1
      %p151 = scmp.ne.s32.totalorder %s146, %s148
      %p152 = scmp.eq.s32.totalorder %s16, 0
      %p153 = por %p151, %p152
      %p154 = scmp.ne.s32.totalorder %s146, %s148
      %p155 = scmp.eq.s32.totalorder %s21, 1
      %p156 = por %p154, %p155
      %p157 = scmp.ne.s32.totalorder %s148, %s149
      %p158 = scmp.eq.s32.totalorder %s21, 0
      %p159 = por %p157, %p158
      %p160 = scmp.ne.s32.totalorder %s148, %s149
      %p161 = scmp.eq.s32.totalorder %s22, 1
      %p162 = por %p160, %p161
      %p164 = scmp.ne.s32.totalorder %s149, %s163
      %p165 = scmp.eq.s32.totalorder %s22, 0
      %p166 = por %p164, %p165
      %s168 = sadd.s32 %s167, 1
      %p171 = scmp.eq.s32.totalorder %s16, 1
      %p172 = scmp.ne.s32.totalorder %s167, %s169
      %p173 = scmp.eq.s32.totalorder %s16, 0
      %p174 = por %p172, %p173
      %p175 = scmp.ne.s32.totalorder %s167, %s169
      %p176 = scmp.eq.s32.totalorder %s21, 1
      %p177 = por %p175, %p176
      %p178 = scmp.ne.s32.totalorder %s169, %s170
      %p179 = scmp.eq.s32.totalorder %s21, 0
      %p180 = por %p178, %p179
      %p181 = scmp.ne.s32.totalorder %s169, %s170
      %p182 = scmp.eq.s32.totalorder %s22, 1
      %p183 = por %p181, %p182
      %p185 = scmp.ne.s32.totalorder %s170, %s184
      %p186 = scmp.eq.s32.totalorder %s22, 0
      %p187 = por %p185, %p186
      %s188 = ssub.s32 %s23, %s35
      %s189 = ssub.s32 %s24, %s31
      %s190 = sor.u32 %s188, %s189
      %p191 = scmp.eq.s32.totalorder %s190, 0
      %s193 = sadd.s32 %s192, 1
      %s194 = scalar_select %p191, %s192, %s193
      %p197 = pneg %p191
      %p198 = scmp.eq.s32.totalorder %s16, 1
      %p199 = por %p197, %p198
      %p200 = scmp.ne.s32.totalorder %s192, %s195
      %p201 = scmp.eq.s32.totalorder %s16, 0
      %p202 = por %p200, %p201
      %p203 = scmp.ne.s32.totalorder %s192, %s195
      %p204 = scmp.eq.s32.totalorder %s21, 1
      %p205 = por %p203, %p204
      %p206 = scmp.ne.s32.totalorder %s195, %s196
      %p207 = scmp.eq.s32.totalorder %s21, 0
      %p208 = por %p206, %p207
      %p209 = scmp.ne.s32.totalorder %s195, %s196
      %p210 = scmp.eq.s32.totalorder %s22, 1
      %p211 = por %p209, %p210
      %p213 = scmp.ne.s32.totalorder %s196, %s212
      %p214 = scmp.eq.s32.totalorder %s22, 0
      %p215 = por %p213, %p214
      %p216 = scmp.le.s32.totalorder 1, %s16
      %p217 = scmp.lt.s32.totalorder %s16, 3
      %p218 = pnand %p216, %p217
      %p219 = pneg %p218
      // Predicated region
      $region9: #{tpu_custom_call.1} parent=5 // pred_check
        _
      $region10: #{tpu_custom_call.1} parent=5 // pred_check_branch
        %221 = sbr.rel (%p218) target = $region12
      $region11: #{tpu_custom_call.1} parent=5 // pred_region
        %s222 = ssub.s32 %s16, 1
        // Predicated region
        $region13: #{tpu_custom_call.1} parent=11 // pred_check
          %p223 = pneg %p75
        $region14: #{tpu_custom_call.1} parent=11 // pred_check_branch
          %225 = sbr.rel (%p223) target = $region16
        $region15: #{tpu_custom_call.1} parent=11 // pred_region
          _
        $region16: #{tpu_custom_call.1} parent=11 // pred_fallthru
          _
        // Predicated region
        $region17: #{tpu_custom_call.1} parent=11 // pred_check
          %p226 = pneg %p96
        $region18: #{tpu_custom_call.1} parent=11 // pred_check_branch
          %228 = sbr.rel (%p226) target = $region20
        $region19: #{tpu_custom_call.1} parent=11 // pred_region
          _
        $region20: #{tpu_custom_call.1} parent=11 // pred_fallthru
          _
        // Predicated region
        $region21: #{tpu_custom_call.1} parent=11 // pred_check
          %p229 = pneg %p117
        $region22: #{tpu_custom_call.1} parent=11 // pred_check_branch
          %231 = sbr.rel (%p229) target = $region24
        $region23: #{tpu_custom_call.1} parent=11 // pred_region
          _
        $region24: #{tpu_custom_call.1} parent=11 // pred_fallthru
          _
        // Predicated region
        $region25: #{tpu_custom_call.1} parent=11 // pred_check
          %p232 = pneg %p138
        $region26: #{tpu_custom_call.1} parent=11 // pred_check_branch
          %234 = sbr.rel (%p232) target = $region28
        $region27: #{tpu_custom_call.1} parent=11 // pred_region
          _
        $region28: #{tpu_custom_call.1} parent=11 // pred_fallthru
          _
        // Predicated region
        $region29: #{tpu_custom_call.1} parent=11 // pred_check
          %p235 = pneg %p159
        $region30: #{tpu_custom_call.1} parent=11 // pred_check_branch
          %237 = sbr.rel (%p235) target = $region32
        $region31: #{tpu_custom_call.1} parent=11 // pred_region
          _
        $region32: #{tpu_custom_call.1} parent=11 // pred_fallthru
          _
        // Predicated region
        $region33: #{tpu_custom_call.1} parent=11 // pred_check
          %p238 = pneg %p180
        $region34: #{tpu_custom_call.1} parent=11 // pred_check_branch
          %240 = sbr.rel (%p238) target = $region36
        $region35: #{tpu_custom_call.1} parent=11 // pred_region
          _
        $region36: #{tpu_custom_call.1} parent=11 // pred_fallthru
          _
      $region12: #{tpu_custom_call.1} parent=5 // pred_fallthru
        _
      %p241 = scmp.lt.s32.totalorder %s16, 2
      // Predicated region
      $region37: #{tpu_custom_call.1} parent=5 // pred_check
        %p242 = pneg %p241
      $region38: #{tpu_custom_call.1} parent=5 // pred_check_branch
        %244 = sbr.rel (%p242) target = $region40
      $region39: #{tpu_custom_call.1} parent=5 // pred_region
        // Predicated region
        $region41: #{tpu_custom_call.1} parent=39 // pred_check
          %p245 = pneg %p48
        $region42: #{tpu_custom_call.1} parent=39 // pred_check_branch
          %247 = sbr.rel (%p245) target = $region44
        $region43: #{tpu_custom_call.1} parent=39 // pred_region
          %p248 = scmp.lt.s32.totalorder %s23, 1
          %s249 = scalar_select %p248, %s23, 1
          %s250 = smul.addr %s249, 2
          %s251 = smul.addr %s250, 4
          %s252 = scalar_lea.vmem %s0, %s251
        $region44: #{tpu_custom_call.1} parent=39 // pred_fallthru
          _
      $region40: #{tpu_custom_call.1} parent=5 // pred_fallthru
        _
      %p253 = scmp.le.s32.totalorder 1, %s16
      %p254 = scmp.lt.s32.totalorder %s16, 3
      %p255 = pnand %p253, %p254
      %p256 = pneg %p255
      // Predicated region
      $region45: #{tpu_custom_call.1} parent=5 // pred_check
        _
      $region46: #{tpu_custom_call.1} parent=5 // pred_check_branch
        %258 = sbr.rel (%p255) target = $region48
      $region47: #{tpu_custom_call.1} parent=5 // pred_region
        %s259 = ssub.s32 %s16, 1
        %p260 = scmp.lt.s32.totalorder %s25, 1
        %s261 = scalar_select %p260, %s25, 1
        %s262 = smul.addr %s261, 2
        %s263 = smul.addr %s262, 4
        %s264 = scalar_lea.vmem %s0, %s263
        %p265 = pneg %p54
        %p266 = pneg %p51
        %p267 = pneg %p75
        %p268 = pneg %p72
        %p269 = pneg %p96
        %p270 = pneg %p93
        %p271 = pneg %p117
        %p272 = pneg %p114
        %p273 = pneg %p138
        %p274 = pneg %p135
        %p275 = pneg %p159
        %p276 = pneg %p156
        %p277 = pneg %p180
        %p278 = pneg %p177
        %p279 = pneg %p208
        %p280 = pneg %p205
        %s281 = sand.u32 %s195, 1
        %s282 = scalar_lea.sflag [#allocation3], %s281
        %s283 = sand.u32 %s195, 1
        %s284 = smul.addr %s283, 8
        %s285 = scalar_lea.vmem [#allocation2], %s284
        %p286 = scmp.lt.s32.totalorder %s25, 1
        %s287 = scalar_select %p286, %s25, 1
        %s288 = smul.addr %s287, 2
        %s289 = smul.addr %s288, 4
        %s290 = scalar_lea.vmem %s0, %s289
        %s292 = smul.u32 %s26, 128
        %s293 = sshra.s32 %s292, 7
        %s294 = sand.u32 %s292, 127
        %s295 = smul.addr %s293, 4
        %s296 = scalar_lea.vmem %s290, %s295
        %v297 = vld [vmem:[%s296] sm:$0xff]
        %v299 = vcombine.high %v297, %v297
        %v301 = vpack.c.bf16 %v297, %v297
        %v302 = vpack.c.bf16 %v299, %v299
        %v303 = vld [vmem:[%s1] sm:$0xf]
        %vm304 = vcmask 31744
        %v306 = vsel %vm304, %v303, 0
        %vm308 = vcmask 1041408
        %v310 = vsel %vm308, %v301, 0
        %v313 = vsel %vm308, %v302, 0
        %315 = vmatprep.subr.bf16.mxu0 %v313
        %316 = vmatpush1.bf16.msra.mxu0 %v310
        %317 = vmatprep.subr.bf16.mxu0 0
        %318 = vmatpush1.bf16.msra.mxu0 0
        %319 = vmatprep.subr.bf16.mxu0 0
        %320 = vmatpush1.bf16.msra.mxu0 0
        %321 = vmatprep.subr.bf16.mxu0 0
        %322 = vmatpush1.bf16.msra.mxu0 0
        %323 = vmatprep.subr.bf16.mxu0 0
        %324 = vmatpush1.bf16.msra.mxu0 0
        %325 = vmatprep.subr.bf16.mxu0 0
        %326 = vmatpush1.bf16.msra.mxu0 0
        %327 = vmatprep.subr.bf16.mxu0 0
        %328 = vmatpush1.bf16.msra.mxu0 0
        %329 = vmatprep.subr.bf16.mxu0 0
        %330 = vmatpush1.bf16.msra.mxu0 0
        %331 = vmatprep.subr.bf16.mxu0 0
        %332 = vmatpush1.bf16.msra.mxu0 0
        %333 = vmatprep.subr.bf16.mxu0 0
        %334 = vmatpush1.bf16.msra.mxu0 0
        %335 = vmatprep.subr.bf16.mxu0 0
        %336 = vmatpush1.bf16.msra.mxu0 0
        %337 = vmatprep.subr.bf16.mxu0 0
        %338 = vmatpush1.bf16.msra.mxu0 0
        %339 = vmatprep.subr.bf16.mxu0 0
        %340 = vmatpush1.bf16.msra.mxu0 0
        %341 = vmatprep.subr.bf16.mxu0 0
        %342 = vmatpush1.bf16.msra.mxu0 0
        %343 = vmatprep.subr.bf16.mxu0 0
        %344 = vmatpush1.bf16.msra.mxu0 0
        %345 = vmatprep.subr.bf16.mxu0 0
        %346 = vmatpush1.bf16.msra.mxu0 0
        %347 = vmatprep.mubr.bf16.mxu0 0
        %348 = vmatmul.mubr.bf16.gmra.mrb[0].mxu0 %v306
        %v349 = vpop.f32.mrb[0].mxu0
        %v350 = vadd.f32 0.0, %v349
        %v351 = vpop.f32.mrb[0].mxu0
        %v352 = vadd.f32 0.0, %v351
        %v353 = vpop.f32.mrb[0].mxu0
        %v354 = vpop.f32.mrb[0].mxu0
        %355 = vdwg.mxu0
        %s356 = scalar_lea.vmem %s1, 4
        %v357 = vld [vmem:[%s356] sm:$0xf]
        %v359 = vsel %vm304, %v357, 0
        %361 = vmatprep.subr.bf16.mxu0 %v313
        %362 = vmatpush1.bf16.msra.mxu0 %v310
        %363 = vmatprep.subr.bf16.mxu0 0
        %364 = vmatpush1.bf16.msra.mxu0 0
        %365 = vmatprep.subr.bf16.mxu0 0
        %366 = vmatpush1.bf16.msra.mxu0 0
        %367 = vmatprep.subr.bf16.mxu0 0
        %368 = vmatpush1.bf16.msra.mxu0 0
        %369 = vmatprep.subr.bf16.mxu0 0
        %370 = vmatpush1.bf16.msra.mxu0 0
        %371 = vmatprep.subr.bf16.mxu0 0
        %372 = vmatpush1.bf16.msra.mxu0 0
        %373 = vmatprep.subr.bf16.mxu0 0
        %374 = vmatpush1.bf16.msra.mxu0 0
        %375 = vmatprep.subr.bf16.mxu0 0
        %376 = vmatpush1.bf16.msra.mxu0 0
        %377 = vmatprep.subr.bf16.mxu0 0
        %378 = vmatpush1.bf16.msra.mxu0 0
        %379 = vmatprep.subr.bf16.mxu0 0
        %380 = vmatpush1.bf16.msra.mxu0 0
        %381 = vmatprep.subr.bf16.mxu0 0
        %382 = vmatpush1.bf16.msra.mxu0 0
        %383 = vmatprep.subr.bf16.mxu0 0
        %384 = vmatpush1.bf16.msra.mxu0 0
        %385 = vmatprep.subr.bf16.mxu0 0
        %386 = vmatpush1.bf16.msra.mxu0 0
        %387 = vmatprep.subr.bf16.mxu0 0
        %388 = vmatpush1.bf16.msra.mxu0 0
        %389 = vmatprep.subr.bf16.mxu0 0
        %390 = vmatpush1.bf16.msra.mxu0 0
        %391 = vmatprep.subr.bf16.mxu0 0
        %392 = vmatpush1.bf16.msra.mxu0 0
        %393 = vmatprep.mubr.bf16.mxu0 0
        %394 = vmatmul.mubr.bf16.gmra.mrb[0].mxu0 %v359
        %v395 = vpop.f32.mrb[0].mxu0
        %v396 = vadd.f32 0.0, %v395
        %v397 = vpop.f32.mrb[0].mxu0
        %v398 = vadd.f32 0.0, %v397
        %v399 = vpop.f32.mrb[0].mxu0
        %v400 = vpop.f32.mrb[0].mxu0
        %401 = vdwg.mxu0
        %s402 = scalar_lea.vmem %s1, 8
        %v403 = vld [vmem:[%s402] sm:$0xf]
        %v405 = vsel %vm304, %v403, 0
        %407 = vmatprep.subr.bf16.mxu0 %v313
        %408 = vmatpush1.bf16.msra.mxu0 %v310
        %409 = vmatprep.subr.bf16.mxu0 0
        %410 = vmatpush1.bf16.msra.mxu0 0
        %411 = vmatprep.subr.bf16.mxu0 0
        %412 = vmatpush1.bf16.msra.mxu0 0
        %413 = vmatprep.subr.bf16.mxu0 0
        %414 = vmatpush1.bf16.msra.mxu0 0
        %415 = vmatprep.subr.bf16.mxu0 0
        %416 = vmatpush1.bf16.msra.mxu0 0
        %417 = vmatprep.subr.bf16.mxu0 0
        %418 = vmatpush1.bf16.msra.mxu0 0
        %419 = vmatprep.subr.bf16.mxu0 0
        %420 = vmatpush1.bf16.msra.mxu0 0
        %421 = vmatprep.subr.bf16.mxu0 0
        %422 = vmatpush1.bf16.msra.mxu0 0
        %423 = vmatprep.subr.bf16.mxu0 0
        %424 = vmatpush1.bf16.msra.mxu0 0
        %425 = vmatprep.subr.bf16.mxu0 0
        %426 = vmatpush1.bf16.msra.mxu0 0
        %427 = vmatprep.subr.bf16.mxu0 0
        %428 = vmatpush1.bf16.msra.mxu0 0
        %429 = vmatprep.subr.bf16.mxu0 0
        %430 = vmatpush1.bf16.msra.mxu0 0
        %431 = vmatprep.subr.bf16.mxu0 0
        %432 = vmatpush1.bf16.msra.mxu0 0
        %433 = vmatprep.subr.bf16.mxu0 0
        %434 = vmatpush1.bf16.msra.mxu0 0
        %435 = vmatprep.subr.bf16.mxu0 0
        %436 = vmatpush1.bf16.msra.mxu0 0
        %437 = vmatprep.subr.bf16.mxu0 0
        %438 = vmatpush1.bf16.msra.mxu0 0
        %439 = vmatprep.mubr.bf16.mxu0 0
        %440 = vmatmul.mubr.bf16.gmra.mrb[0].mxu0 %v405
        %v441 = vpop.f32.mrb[0].mxu0
        %v442 = vadd.f32 0.0, %v441
        %v443 = vpop.f32.mrb[0].mxu0
        %v444 = vadd.f32 0.0, %v443
        %v445 = vpop.f32.mrb[0].mxu0
        %v446 = vpop.f32.mrb[0].mxu0
        %447 = vdwg.mxu0
        %448 = vrot.lane.b32.xlu0 %v350, 1
        %v449 = vpop.permute.xlu0 %448
        %450 = vrot.lane.b32.xlu0 %v352, 1
        %v451 = vpop.permute.xlu0 %450
        %v452 = vlaneseq
        %v453 = vand.u32 %v452, 127
        %vm454 = vcmp.lt.s32.totalorder %v453, 1
        %v455 = vsel %vm454, %v449, %v451
        %v456 = vsel %vm454, %v451, %v449
        %v457 = vadd.f32 %v456, %v396
        %v458 = vadd.f32 %v455, %v398
        %459 = vrot.lane.b32.xlu0 %v442, 127
        %v460 = vpop.permute.xlu0 %459
        %461 = vrot.lane.b32.xlu0 %v444, 127
        %v462 = vpop.permute.xlu0 %461
        %vm463 = vcmp.lt.s32.totalorder %v453, 127
        %v464 = vsel %vm463, %v460, %v462
        %v465 = vsel %vm463, %v462, %v460
        %v466 = vadd.f32 %v457, %v464
        %v467 = vadd.f32 %v458, %v465
        %v468 = vld [vmem:[%s2] sm:$0xff]
        %470 = vset.pattern.permute.xlu0 0
        %471 = vperm.xlu0 %470, %v468
        %v472 = vpop.permute.xlu0 %471
        %v474 = vadd.f32 %v466, %v472
        %v475 = vadd.f32 %v467, %v472
        %v476 = vmax.f32 %v474, 0.0
        %v477 = vmax.f32 %v475, 0.0
        %v478 = vadd.s32 %v453, 128
        %v479 = vstv %s292
        %v480 = vadd.s32 %v479, %v453
        %v481 = vadd.s32 %v479, %v478
        %v482 = vsub.s32 %v480, 2
        %v483 = vsub.s32 %v481, 2
        %vm484 = vcmp.ge.s32.totalorder %v482, 0
        %vm485 = vcmp.ge.s32.totalorder %v483, 0
        %vm486 = vcmp.lt.s32.totalorder %v482, 16
        %vm487 = vcmp.lt.s32.totalorder %v483, 16
        %vm488 = vmand %vm484, %vm486
        %vm489 = vmand %vm485, %vm487
        %v490 = vsel %vm488, 1, 0
        %v491 = vsel %vm489, 1, 0
        %vm492 = vcmp.eq.s32.totalorder %v490, 1
        %vm493 = vcmp.eq.s32.totalorder %v491, 1
        %v494 = vsel %vm492, %v476, 0.0
        %v495 = vsel %vm493, %v477, 0.0
        %v496 = vpack.c.bf16 %v494, %v494
        %v497 = vpack.c.bf16 %v495, %v495
        %v498 = vld [vmem:[%s3] sm:$0xf]
        %vm499 = vcmask 64512
        %v501 = vsel %vm499, %v498, 0
        %vm503 = vcmask 1043456
        %v505 = vsel %vm503, %v496, 0
        %v508 = vsel %vm503, %v497, 0
        %510 = vmatprep.subr.bf16.mxu0 %v508
        %511 = vmatpush1.bf16.msra.mxu0 %v505
        %512 = vmatprep.subr.bf16.mxu0 0
        %513 = vmatpush1.bf16.msra.mxu0 0
        %514 = vmatprep.subr.bf16.mxu0 0
        %515 = vmatpush1.bf16.msra.mxu0 0
        %516 = vmatprep.subr.bf16.mxu0 0
        %517 = vmatpush1.bf16.msra.mxu0 0
        %518 = vmatprep.subr.bf16.mxu0 0
        %519 = vmatpush1.bf16.msra.mxu0 0
        %520 = vmatprep.subr.bf16.mxu0 0
        %521 = vmatpush1.bf16.msra.mxu0 0
        %522 = vmatprep.subr.bf16.mxu0 0
        %523 = vmatpush1.bf16.msra.mxu0 0
        %524 = vmatprep.subr.bf16.mxu0 0
        %525 = vmatpush1.bf16.msra.mxu0 0
        %526 = vmatprep.subr.bf16.mxu0 0
        %527 = vmatpush1.bf16.msra.mxu0 0
        %528 = vmatprep.subr.bf16.mxu0 0
        %529 = vmatpush1.bf16.msra.mxu0 0
        %530 = vmatprep.subr.bf16.mxu0 0
        %531 = vmatpush1.bf16.msra.mxu0 0
        %532 = vmatprep.subr.bf16.mxu0 0
        %533 = vmatpush1.bf16.msra.mxu0 0
        %534 = vmatprep.subr.bf16.mxu0 0
        %535 = vmatpush1.bf16.msra.mxu0 0
        %536 = vmatprep.subr.bf16.mxu0 0
        %537 = vmatpush1.bf16.msra.mxu0 0
        %538 = vmatprep.subr.bf16.mxu0 0
        %539 = vmatpush1.bf16.msra.mxu0 0
        %540 = vmatprep.subr.bf16.mxu0 0
        %541 = vmatpush1.bf16.msra.mxu0 0
        %542 = vmatprep.mubr.bf16.mxu0 0
        %543 = vmatmul.mubr.bf16.gmra.mrb[0].mxu0 %v501
        %v544 = vpop.f32.mrb[0].mxu0
        %v545 = vadd.f32 0.0, %v544
        %v546 = vpop.f32.mrb[0].mxu0
        %v547 = vadd.f32 0.0, %v546
        %v548 = vpop.f32.mrb[0].mxu0
        %v549 = vpop.f32.mrb[0].mxu0
        %550 = vdwg.mxu0
        %s551 = scalar_lea.vmem %s3, 4
        %v552 = vld [vmem:[%s551] sm:$0xf]
        %v554 = vsel %vm499, %v552, 0
        %556 = vmatprep.subr.bf16.mxu0 %v508
        %557 = vmatpush1.bf16.msra.mxu0 %v505
        %558 = vmatprep.subr.bf16.mxu0 0
        %559 = vmatpush1.bf16.msra.mxu0 0
        %560 = vmatprep.subr.bf16.mxu0 0
        %561 = vmatpush1.bf16.msra.mxu0 0
        %562 = vmatprep.subr.bf16.mxu0 0
        %563 = vmatpush1.bf16.msra.mxu0 0
        %564 = vmatprep.subr.bf16.mxu0 0
        %565 = vmatpush1.bf16.msra.mxu0 0
        %566 = vmatprep.subr.bf16.mxu0 0
        %567 = vmatpush1.bf16.msra.mxu0 0
        %568 = vmatprep.subr.bf16.mxu0 0
        %569 = vmatpush1.bf16.msra.mxu0 0
        %570 = vmatprep.subr.bf16.mxu0 0
        %571 = vmatpush1.bf16.msra.mxu0 0
        %572 = vmatprep.subr.bf16.mxu0 0
        %573 = vmatpush1.bf16.msra.mxu0 0
        %574 = vmatprep.subr.bf16.mxu0 0
        %575 = vmatpush1.bf16.msra.mxu0 0
        %576 = vmatprep.subr.bf16.mxu0 0
        %577 = vmatpush1.bf16.msra.mxu0 0
        %578 = vmatprep.subr.bf16.mxu0 0
        %579 = vmatpush1.bf16.msra.mxu0 0
        %580 = vmatprep.subr.bf16.mxu0 0
        %581 = vmatpush1.bf16.msra.mxu0 0
        %582 = vmatprep.subr.bf16.mxu0 0
        %583 = vmatpush1.bf16.msra.mxu0 0
        %584 = vmatprep.subr.bf16.mxu0 0
        %585 = vmatpush1.bf16.msra.mxu0 0
        %586 = vmatprep.subr.bf16.mxu0 0
        %587 = vmatpush1.bf16.msra.mxu0 0
        %588 = vmatprep.mubr.bf16.mxu0 0
        %589 = vmatmul.mubr.bf16.gmra.mrb[0].mxu0 %v554
        %v590 = vpop.f32.mrb[0].mxu0
        %v591 = vadd.f32 0.0, %v590
        %v592 = vpop.f32.mrb[0].mxu0
        %v593 = vadd.f32 0.0, %v592
        %v594 = vpop.f32.mrb[0].mxu0
        %v595 = vpop.f32.mrb[0].mxu0
        %596 = vdwg.mxu0
        %s597 = scalar_lea.vmem %s3, 8
        %v598 = vld [vmem:[%s597] sm:$0xf]
        %v600 = vsel %vm499, %v598, 0
        %602 = vmatprep.subr.bf16.mxu0 %v508
        %603 = vmatpush1.bf16.msra.mxu0 %v505
        %604 = vmatprep.subr.bf16.mxu0 0
        %605 = vmatpush1.bf16.msra.mxu0 0
        %606 = vmatprep.subr.bf16.mxu0 0
        %607 = vmatpush1.bf16.msra.mxu0 0
        %608 = vmatprep.subr.bf16.mxu0 0
        %609 = vmatpush1.bf16.msra.mxu0 0
        %610 = vmatprep.subr.bf16.mxu0 0
        %611 = vmatpush1.bf16.msra.mxu0 0
        %612 = vmatprep.subr.bf16.mxu0 0
        %613 = vmatpush1.bf16.msra.mxu0 0
        %614 = vmatprep.subr.bf16.mxu0 0
        %615 = vmatpush1.bf16.msra.mxu0 0
        %616 = vmatprep.subr.bf16.mxu0 0
        %617 = vmatpush1.bf16.msra.mxu0 0
        %618 = vmatprep.subr.bf16.mxu0 0
        %619 = vmatpush1.bf16.msra.mxu0 0
        %620 = vmatprep.subr.bf16.mxu0 0
        %621 = vmatpush1.bf16.msra.mxu0 0
        %622 = vmatprep.subr.bf16.mxu0 0
        %623 = vmatpush1.bf16.msra.mxu0 0
        %624 = vmatprep.subr.bf16.mxu0 0
        %625 = vmatpush1.bf16.msra.mxu0 0
        %626 = vmatprep.subr.bf16.mxu0 0
        %627 = vmatpush1.bf16.msra.mxu0 0
        %628 = vmatprep.subr.bf16.mxu0 0
        %629 = vmatpush1.bf16.msra.mxu0 0
        %630 = vmatprep.subr.bf16.mxu0 0
        %631 = vmatpush1.bf16.msra.mxu0 0
        %632 = vmatprep.subr.bf16.mxu0 0
        %633 = vmatpush1.bf16.msra.mxu0 0
        %634 = vmatprep.mubr.bf16.mxu0 0
        %635 = vmatmul.mubr.bf16.gmra.mrb[0].mxu0 %v600
        %v636 = vpop.f32.mrb[0].mxu0
        %v637 = vadd.f32 0.0, %v636
        %v638 = vpop.f32.mrb[0].mxu0
        %v639 = vadd.f32 0.0, %v638
        %v640 = vpop.f32.mrb[0].mxu0
        %v641 = vpop.f32.mrb[0].mxu0
        %642 = vdwg.mxu0
        %643 = vrot.lane.b32.xlu0 %v545, 1
        %v644 = vpop.permute.xlu0 %643
        %645 = vrot.lane.b32.xlu0 %v547, 1
        %v646 = vpop.permute.xlu0 %645
        %v647 = vsel %vm454, %v644, %v646
        %v648 = vsel %vm454, %v646, %v644
        %v649 = vadd.f32 %v648, %v591
        %v650 = vadd.f32 %v647, %v593
        %651 = vrot.lane.b32.xlu0 %v637, 127
        %v652 = vpop.permute.xlu0 %651
        %653 = vrot.lane.b32.xlu0 %v639, 127
        %v654 = vpop.permute.xlu0 %653
        %v655 = vsel %vm463, %v652, %v654
        %v656 = vsel %vm463, %v654, %v652
        %v657 = vadd.f32 %v649, %v655
        %v658 = vadd.f32 %v650, %v656
        %v659 = vld [vmem:[%s4] sm:$0xff]
        %661 = vset.pattern.permute.xlu0 0
        %662 = vperm.xlu0 %661, %v659
        %v663 = vpop.permute.xlu0 %662
        %v665 = vadd.f32 %v657, %v663
        %v666 = vadd.f32 %v658, %v663
        %v667 = vld [vmem:[%s5] sm:$0xf]
        %v668 = vld [vmem:[%s6] sm:$0xff]
        %670 = vset.pattern.permute.xlu0 0
        %671 = vperm.xlu0 %670, %v668
        %v672 = vpop.permute.xlu0 %671
        %v675 = vsel %vm304, %v667, 0
        %677 = vmatprep.subr.bf16.mxu0 %v313
        %678 = vmatpush1.bf16.msra.mxu0 %v310
        %679 = vmatprep.subr.bf16.mxu0 0
        %680 = vmatpush1.bf16.msra.mxu0 0
        %681 = vmatprep.subr.bf16.mxu0 0
        %682 = vmatpush1.bf16.msra.mxu0 0
        %683 = vmatprep.subr.bf16.mxu0 0
        %684 = vmatpush1.bf16.msra.mxu0 0
        %685 = vmatprep.subr.bf16.mxu0 0
        %686 = vmatpush1.bf16.msra.mxu0 0
        %687 = vmatprep.subr.bf16.mxu0 0
        %688 = vmatpush1.bf16.msra.mxu0 0
        %689 = vmatprep.subr.bf16.mxu0 0
        %690 = vmatpush1.bf16.msra.mxu0 0
        %691 = vmatprep.subr.bf16.mxu0 0
        %692 = vmatpush1.bf16.msra.mxu0 0
        %693 = vmatprep.subr.bf16.mxu0 0
        %694 = vmatpush1.bf16.msra.mxu0 0
        %695 = vmatprep.subr.bf16.mxu0 0
        %696 = vmatpush1.bf16.msra.mxu0 0
        %697 = vmatprep.subr.bf16.mxu0 0
        %698 = vmatpush1.bf16.msra.mxu0 0
        %699 = vmatprep.subr.bf16.mxu0 0
        %700 = vmatpush1.bf16.msra.mxu0 0
        %701 = vmatprep.subr.bf16.mxu0 0
        %702 = vmatpush1.bf16.msra.mxu0 0
        %703 = vmatprep.subr.bf16.mxu0 0
        %704 = vmatpush1.bf16.msra.mxu0 0
        %705 = vmatprep.subr.bf16.mxu0 0
        %706 = vmatpush1.bf16.msra.mxu0 0
        %707 = vmatprep.subr.bf16.mxu0 0
        %708 = vmatpush1.bf16.msra.mxu0 0
        %709 = vmatprep.mubr.bf16.mxu0 0
        %710 = vmatmul.mubr.bf16.gmra.mrb[0].mxu0 %v675
        %v711 = vpop.f32.mrb[0].mxu0
        %v712 = vadd.f32 %v672, %v711
        %v713 = vpop.f32.mrb[0].mxu0
        %v714 = vadd.f32 %v672, %v713
        %v715 = vpop.f32.mrb[0].mxu0
        %v716 = vpop.f32.mrb[0].mxu0
        %717 = vdwg.mxu0
        %v718 = vadd.f32 %v665, %v712
        %v719 = vadd.f32 %v666, %v714
        %v720 = vmax.f32 %v718, 0.0
        %v721 = vmax.f32 %v719, 0.0
        %722 = vrot.lane.b32.xlu0 %v720, 126
        %v723 = vpop.permute.xlu0 %722
        %724 = vrot.lane.b32.xlu0 %v721, 126
        %v725 = vpop.permute.xlu0 %724
        %vm726 = vcmp.lt.s32.totalorder %v453, 126
        %v727 = vsel %vm726, %v723, %v725
        %728 = vst [vmem:[%s285] sm:$0xff] %v727
        %s729 = sand.u32 %s195, 1
        %s730 = scalar_lea.sflag [#allocation3], %s729
        %s731 = sand.u32 %s195, 1
        %s732 = smul.addr %s731, 8
        %s733 = scalar_lea.vmem [#allocation2], %s732
        // Predicated region
        $region49: #{tpu_custom_call.1} parent=47 // pred_check
          %p734 = pneg %p205
        $region50: #{tpu_custom_call.1} parent=47 // pred_check_branch
          %736 = sbr.rel (%p734) target = $region52
        $region51: #{tpu_custom_call.1} parent=47 // pred_region
          %s738 = ssub.s32 128, 128
          %739 = vsyncadd %s730, %s738
          %s740 = sadd.s32 %s26, %s25
          %s741 = smul.addr %s740, 128
          %s742 = scalar_lea.hbm %s7, %s741
          %s744 = sshll.u32 %s733, 4
          %s745 = int_to_ptr.vmem [resolvable:$true] %s744
          %747 = dma.vmem_to_hbm [thread:$0]  %s745, 128, %s742, %s730
        $region52: #{tpu_custom_call.1} parent=47 // pred_fallthru
          _
      $region48: #{tpu_custom_call.1} parent=5 // pred_fallthru
        _
      %p748 = scmp.le.s32.totalorder 2, %s16
      // Predicated region
      $region53: #{tpu_custom_call.1} parent=5 // pred_check
        %p749 = pneg %p748
      $region54: #{tpu_custom_call.1} parent=5 // pred_check_branch
        %751 = sbr.rel (%p749) target = $region56
      $region55: #{tpu_custom_call.1} parent=5 // pred_region
        %s752 = ssub.s32 %s16, 2
        // Predicated region
        $region57: #{tpu_custom_call.1} parent=55 // pred_check
          %p753 = pneg %p211
        $region58: #{tpu_custom_call.1} parent=55 // pred_check_branch
          %755 = sbr.rel (%p753) target = $region60
        $region59: #{tpu_custom_call.1} parent=55 // pred_region
          %s756 = sand.u32 %s196, 1
          %s757 = scalar_lea.sflag [#allocation3], %s756
          %s758 = sand.u32 %s196, 1
          %s759 = smul.addr %s758, 8
          %s760 = scalar_lea.vmem [#allocation2], %s759
          %761 = dma.done %s757, 128
        $region60: #{tpu_custom_call.1} parent=55 // pred_fallthru
          _
      $region56: #{tpu_custom_call.1} parent=5 // pred_fallthru
        _
    $region6: #{tpu_custom_call.1} parent=1 // loop_footer
      %s20 = sadd.s32 1, %s16
    $region7: #{tpu_custom_call.1} parent=1 // loop_footer_branch
      %15 = sbr.rel target = $region3
    $region8: #{tpu_custom_call.1} parent=1 // loop_exit
      _
    %762 = vsyncpa [#allocation3], 1
    %s763 = scalar_lea.sflag [#allocation3], 1
    %764 = vsyncpa %s763, 1

</llo_original>
